<compile_context>
chip_gen: v5e
topology: v5e:2x2
jax: 0.10.0
libtpu: 0.0.40
codegen_flags: <defaults>
</compile_context>

<pallas_src>
import jax
import jax.numpy as jnp
from jax.experimental import pallas as pl
from jax.experimental.pallas import tpu as pltpu


# ---------------------------------------------------------------------------
# Pallas kernel: one MXU matmul per packed mode-group.
#   x_ref: (GPB, B, Wb)   stacked [re | im] of G modes along the lane axis
#   w_ref: (GPB, Wb, Wb)  block-diagonal 2x2 real-block complex weights
#   o_ref: (GPB, B, Wb)   [out_re | out_im] per mode, lane-dense
# ---------------------------------------------------------------------------
def _grouped_complex_matmul_kernel(x_ref, w_ref, o_ref):
    for g in range(x_ref.shape[0]):  # GPB is a small static int -> unrolled
        o_ref[g] = jnp.dot(x_ref[g], w_ref[g],
                           preferred_element_type=jnp.float32)


def _grouping(L, D, *, group_target=256, max_w_block_bytes=8 << 20):
    """Pick mode-group size G and groups-per-grid-step GPB.

    G modes are packed block-diagonally into a (G*2D, G*2D) weight so the
    lane width is ~group_target (256 = native MXU tile on v6e/v7x, and a
    multiple of 128 for v5e). GPB groups share one grid step so small
    problems collapse to a single step while large ones keep a parallel
    grid axis (v7x megacore) and stay inside a per-step VMEM budget.
    """
    D2 = 2 * D
    G = max(1, group_target // D2)
    NG = -(-L // G)                                   # ceil(L / G)
    Wb = G * D2
    GPB = max(1, min(NG, max_w_block_bytes // (Wb * Wb * 4)))
    NB = -(-NG // GPB)                                # grid size
    NGp = NB * GPB                                    # padded #groups
    return G, D2, Wb, GPB, NB, NGp


def pack_weights(weights_re, weights_im, L, *, group_target=256):
    """(D, D, modes1) real/imag weights -> block-diag packed (NGp, Wb, Wb).

    Constant per parameter set, so this relayout runs once, off the hot path.
    """
    D = weights_re.shape[0]
    G, D2, Wb, GPB, NB, NGp = _grouping(L, D, group_target=group_target)
    Lp = NGp * G

    wr = jnp.transpose(weights_re[:, :, :L], (2, 0, 1)).astype(jnp.float32)
    wi = jnp.transpose(weights_im[:, :, :L], (2, 0, 1)).astype(jnp.float32)
    pad = Lp - L
    if pad:
        wr = jnp.pad(wr, ((0, pad), (0, 0), (0, 0)))
        wi = jnp.pad(wi, ((0, pad), (0, 0), (0, 0)))

    # 2x2 real-block complex form per mode: [[wr, wi], [-wi, wr]]  (Lp, 2D, 2D)
    w2 = jnp.concatenate(
        [jnp.concatenate([wr, wi], axis=2),
         jnp.concatenate([-wi, wr], axis=2)], axis=1)

    # Block-diagonal over G modes per group: (NGp, Wb, Wb)
    w2 = w2.reshape(NGp, G, D2, D2)
    eye = jnp.eye(G, dtype=w2.dtype)
    wblk = jnp.einsum('ngij,gh->ngihj', w2, eye).reshape(NGp, Wb, Wb)
    return wblk


def mode_mix_pallas(xr, xi, wblk, L, *, group_target=256):
    """xr, xi: (L, B, D) retained-mode spectrum -> (out_re, out_im): (L, B, D)."""
    _, B, D = xr.shape
    G, D2, Wb, GPB, NB, NGp = _grouping(L, D, group_target=group_target)
    Lp = NGp * G
    assert wblk.shape == (NGp, Wb, Wb), (wblk.shape, (NGp, Wb, Wb))

    # Stack re/im and pack G modes along the lane axis: (NGp, B, Wb)
    x = jnp.concatenate([xr, xi], axis=2)               # (L, B, 2D)
    pad = Lp - L
    if pad:
        x = jnp.pad(x, ((0, pad), (0, 0), (0, 0)))
    x = x.reshape(NGp, G, B, D2).transpose(0, 2, 1, 3).reshape(NGp, B, Wb)

    out = pl.pallas_call(
        _grouped_complex_matmul_kernel,
        out_shape=jax.ShapeDtypeStruct((NGp, B, Wb), jnp.float32),
        grid_spec=pltpu.PrefetchScalarGridSpec(
            num_scalar_prefetch=0,
            grid=(NB,),
            in_specs=[pl.BlockSpec((GPB, B, Wb), lambda b: (b, 0, 0)),
                      pl.BlockSpec((GPB, Wb, Wb), lambda b: (b, 0, 0))],
            out_specs=pl.BlockSpec((GPB, B, Wb), lambda b: (b, 0, 0)),
        ),
        compiler_params=pltpu.CompilerParams(
            dimension_semantics=("parallel",)),
    )(x, wblk)

    # Ungroup: (NGp, B, Wb) -> (Lp, B, 2D) -> re/im halves (L, B, D)
    out = out.reshape(NGp, B, G, D2).transpose(0, 2, 1, 3).reshape(Lp, B, D2)
    return out[:L, :, :D], out[:L, :, D:]


def sparse_kernel_ft1d_forward(x, wblk, L):
    """SparseKernelFT1d.forward using pre-packed weights (see pack_weights).

    x: (B, N, c, k) float32; wblk: packed weights; L = min(modes1, N//2+1).
    Returns (B, N, c, k) float32.
    """
    B, N, c, k = x.shape
    D = c * k
    M = N // 2 + 1

    xv = jnp.transpose(x.reshape(B, N, D), (0, 2, 1))          # (B, D, N)
    # TODO(synk): rfft/irfft have no Pallas TPU primitive; kept in plain JAX.
    x_fft = jnp.fft.rfft(xv, axis=-1)                          # (B, D, M) c64

    xt = jnp.transpose(x_fft[:, :, :L], (2, 0, 1))             # (L, B, D) c64
    xr = jnp.real(xt).astype(jnp.float32)
    xi = jnp.imag(xt).astype(jnp.float32)

    out_re, out_im = mode_mix_pallas(xr, xi, wblk, L)          # (L, B, D) each

    out_vals = jnp.transpose(out_re + 1j * out_im, (1, 2, 0))  # (B, D, L)
    out_ft = jnp.zeros((B, D, M), dtype=jnp.complex64).at[:, :, :L].set(
        out_vals.astype(jnp.complex64))
    x_out = jnp.fft.irfft(out_ft, n=N, axis=-1)                # (B, D, N) f32
    return jnp.transpose(x_out, (0, 2, 1)).reshape(B, N, c, k)


def reference_forward(x, weights_re, weights_im, modes1):
    """Pure-JAX reference matching the PyTorch module semantics."""
    B, N, c, k = x.shape
    D = c * k
    M = N // 2 + 1
    L = min(modes1, M)
    xv = jnp.transpose(x.reshape(B, N, D), (0, 2, 1))
    x_fft = jnp.fft.rfft(xv, axis=-1)
    w = (weights_re + 1j * weights_im).astype(jnp.complex64)[:, :, :L]
    out = jnp.einsum('bix,iox->box', x_fft[:, :, :L], w)
    out_ft = jnp.zeros((B, D, M), dtype=jnp.complex64).at[:, :, :L].set(out)
    x_out = jnp.fft.irfft(out_ft, n=N, axis=-1)
    return jnp.transpose(x_out, (0, 2, 1)).reshape(B, N, c, k)


if __name__ == "__main__":
    # Module hyper-parameters (deterministic synthetic init, no checkpoint).
    k = 8
    c = 4
    alpha = 10          # modes1
    B, N = 2, 16        # input: (B, N, c, k)
    D = c * k
    scale = 1.0 / (c * k * c * k)

    key = jax.random.PRNGKey(0)
    kx, kwr, kwi = jax.random.split(key, 3)

    # weights1 = scale * torch.rand(c*k, c*k, modes1, dtype=cfloat)
    # -> uniform [0,1) for both real and imaginary parts, scaled.
    w_re = scale * jax.random.uniform(kwr, (D, D, alpha), dtype=jnp.float32)
    w_im = scale * jax.random.uniform(kwi, (D, D, alpha), dtype=jnp.float32)
    x = jax.random.normal(kx, (B, N, c, k), dtype=jnp.float32)

    L = min(alpha, N // 2 + 1)

    # Weight packing is constant per parameter set -> done once, off hot path.
    wblk = jax.block_until_ready(pack_weights(w_re, w_im, L))

    fwd = jax.jit(sparse_kernel_ft1d_forward, static_argnums=(2,))
    out = jax.block_until_ready(fwd(x, wblk, L))

    ref = jax.block_until_ready(reference_forward(x, w_re, w_im, alpha))

    assert out.shape == (B, N, c, k), out.shape
    assert out.dtype == jnp.float32, out.dtype
    max_err = float(jnp.max(jnp.abs(out - ref)))
    assert jnp.allclose(out, ref, rtol=1e-4, atol=2e-5), max_err

    print("KERNEL_OK")
</pallas_src>

<mosaic_0001>
module attributes {stable_mosaic.version = 11 : i64} {
  func.func @_grouped_complex_matmul_kernel(%arg0: i32, %arg1: memref<3x2x256xf32, #tpu.memory_space<vmem>>, %arg2: memref<3x256x256xf32, #tpu.memory_space<vmem>>, %arg3: memref<3x2x256xf32, #tpu.memory_space<vmem>>) attributes {dimension_semantics = [#tpu.dimension_semantics<parallel>], iteration_bounds = array<i64: 1>, scalar_prefetch = 0 : i64, scratch_operands = 0 : i64, tpu.core_type = #tpu.core_type<tc>, window_params = [{transform_indices = @transform_0, window_bounds = array<i64: 3, 2, 256>}, {transform_indices = @transform_1, window_bounds = array<i64: 3, 256, 256>}, {transform_indices = @transform_2, window_bounds = array<i64: 3, 2, 256>}]} {
    %c0 = arith.constant 0 : index
    %c0_0 = arith.constant 0 : index
    %c0_1 = arith.constant 0 : index
    %0 = vector.load %arg1[%c0, %c0_0, %c0_1] : memref<3x2x256xf32, #tpu.memory_space<vmem>>, vector<1x2x256xf32>
    %1 = vector.shape_cast %0 : vector<1x2x256xf32> to vector<2x256xf32>
    %c0_2 = arith.constant 0 : index
    %c0_3 = arith.constant 0 : index
    %c0_4 = arith.constant 0 : index
    %2 = vector.load %arg2[%c0_2, %c0_3, %c0_4] : memref<3x256x256xf32, #tpu.memory_space<vmem>>, vector<1x256x256xf32>
    %3 = vector.shape_cast %2 : vector<1x256x256xf32> to vector<256x256xf32>
    %cst = arith.constant dense<0.000000e+00> : vector<2x256xf32>
    %4 = tpu.matmul %1, %3, %cst {dimension_numbers = #tpu.dot_dimension_numbers<[1], [0], [0], [1], [0, 0, 1, 1], [], []>} : vector<2x256xf32>, vector<256x256xf32>, vector<2x256xf32> -> vector<2x256xf32>
    %c0_5 = arith.constant 0 : index
    %c0_6 = arith.constant 0 : index
    %c0_7 = arith.constant 0 : index
    %5 = vector.load %arg3[%c0_5, %c0_6, %c0_7] : memref<3x2x256xf32, #tpu.memory_space<vmem>>, vector<1x2x256xf32>
    %6 = vector.shape_cast %5 : vector<1x2x256xf32> to vector<2x256xf32>
    %7 = vector.shape_cast %4 : vector<2x256xf32> to vector<1x2x256xf32>
    tpu.vector_store %arg3[%c0_5, %c0_6, %c0_7], %7 {strides = array<i32>} : memref<3x2x256xf32, #tpu.memory_space<vmem>>, vector<1x2x256xf32>,
    %c1 = arith.constant 1 : index
    %c0_8 = arith.constant 0 : index
    %c0_9 = arith.constant 0 : index
    %8 = vector.load %arg1[%c1, %c0_8, %c0_9] : memref<3x2x256xf32, #tpu.memory_space<vmem>>, vector<1x2x256xf32>
    %9 = vector.shape_cast %8 : vector<1x2x256xf32> to vector<2x256xf32>
    %c1_10 = arith.constant 1 : index
    %c0_11 = arith.constant 0 : index
    %c0_12 = arith.constant 0 : index
    %10 = vector.load %arg2[%c1_10, %c0_11, %c0_12] : memref<3x256x256xf32, #tpu.memory_space<vmem>>, vector<1x256x256xf32>
    %11 = vector.shape_cast %10 : vector<1x256x256xf32> to vector<256x256xf32>
    %cst_13 = arith.constant dense<0.000000e+00> : vector<2x256xf32>
    %12 = tpu.matmul %9, %11, %cst_13 {dimension_numbers = #tpu.dot_dimension_numbers<[1], [0], [0], [1], [0, 0, 1, 1], [], []>} : vector<2x256xf32>, vector<256x256xf32>, vector<2x256xf32> -> vector<2x256xf32>
    %c1_14 = arith.constant 1 : index
    %c0_15 = arith.constant 0 : index
    %c0_16 = arith.constant 0 : index
    %13 = vector.load %arg3[%c1_14, %c0_15, %c0_16] : memref<3x2x256xf32, #tpu.memory_space<vmem>>, vector<1x2x256xf32>
    %14 = vector.shape_cast %13 : vector<1x2x256xf32> to vector<2x256xf32>
    %15 = vector.shape_cast %12 : vector<2x256xf32> to vector<1x2x256xf32>
    tpu.vector_store %arg3[%c1_14, %c0_15, %c0_16], %15 {strides = array<i32>} : memref<3x2x256xf32, #tpu.memory_space<vmem>>, vector<1x2x256xf32>,
    %c2 = arith.constant 2 : index
    %c0_17 = arith.constant 0 : index
    %c0_18 = arith.constant 0 : index
    %16 = vector.load %arg1[%c2, %c0_17, %c0_18] : memref<3x2x256xf32, #tpu.memory_space<vmem>>, vector<1x2x256xf32>
    %17 = vector.shape_cast %16 : vector<1x2x256xf32> to vector<2x256xf32>
    %c2_19 = arith.constant 2 : index
    %c0_20 = arith.constant 0 : index
    %c0_21 = arith.constant 0 : index
    %18 = vector.load %arg2[%c2_19, %c0_20, %c0_21] : memref<3x256x256xf32, #tpu.memory_space<vmem>>, vector<1x256x256xf32>
    %19 = vector.shape_cast %18 : vector<1x256x256xf32> to vector<256x256xf32>
    %cst_22 = arith.constant dense<0.000000e+00> : vector<2x256xf32>
    %20 = tpu.matmul %17, %19, %cst_22 {dimension_numbers = #tpu.dot_dimension_numbers<[1], [0], [0], [1], [0, 0, 1, 1], [], []>} : vector<2x256xf32>, vector<256x256xf32>, vector<2x256xf32> -> vector<2x256xf32>
    %c2_23 = arith.constant 2 : index
    %c0_24 = arith.constant 0 : index
    %c0_25 = arith.constant 0 : index
    %21 = vector.load %arg3[%c2_23, %c0_24, %c0_25] : memref<3x2x256xf32, #tpu.memory_space<vmem>>, vector<1x2x256xf32>
    %22 = vector.shape_cast %21 : vector<1x2x256xf32> to vector<2x256xf32>
    %23 = vector.shape_cast %20 : vector<2x256xf32> to vector<1x2x256xf32>
    tpu.vector_store %arg3[%c2_23, %c0_24, %c0_25], %23 {strides = array<i32>} : memref<3x2x256xf32, #tpu.memory_space<vmem>>, vector<1x2x256xf32>,
    return
  }
  func.func @transform_0(%arg0: i32) -> (i32, i32, i32) {
    %c0_i32 = arith.constant 0 : i32
    %c0_i32_0 = arith.constant 0 : i32
    %c0_i32_1 = arith.constant 0 : i32
    return %arg0, %c0_i32, %c0_i32_0 : i32, i32, i32
  }
  func.func @transform_1(%arg0: i32) -> (i32, i32, i32) {
    %c0_i32 = arith.constant 0 : i32
    %c0_i32_0 = arith.constant 0 : i32
    %c0_i32_1 = arith.constant 0 : i32
    return %arg0, %c0_i32, %c0_i32_0 : i32, i32, i32
  }
  func.func @transform_2(%arg0: i32) -> (i32, i32, i32) {
    %c0_i32 = arith.constant 0 : i32
    %c0_i32_0 = arith.constant 0 : i32
    %c0_i32_1 = arith.constant 0 : i32
    return %arg0, %c0_i32, %c0_i32_0 : i32, i32, i32
  }
}

</mosaic_0001>

<llo_original>
// kernel: reverse.1
$region0: #{reverse.1}
  %s0 = inlined_call_operand.vmem [shape: f32[2,32,7], index: 0, kind: input, shape index: {}]
  %s1 = inlined_call_operand.vmem [shape: f32[2,32,7], index: 1, kind: output, shape index: {}]
  $region1: #{reverse.1} parent=0
    #allocation0 [shape = 'u8[16384]{0}', space=vmem, size = 0x4000, scoped, tag = 'operand span for operand 0']
    #allocation1 [shape = 'u8[8192]{0}', space=vmem, size = 0x2000, scoped, tag = 'operand span for operand 1']
    %s2 = scalar_lea.vmem [#allocation0], 8
    // Predicated region
    $region2: #{reverse.1} parent=1 // pred_check
      _
    $region3: #{reverse.1} parent=1 // pred_check_branch
      %4 = sbr.rel (0) target = $region5
    $region4: #{reverse.1} parent=1 // pred_region
      // Predicated region
      $region6: #{reverse.1} parent=4 // pred_check
        _
      $region7: #{reverse.1} parent=4 // pred_check_branch
        %6 = sbr.rel (0) target = $region9
      $region8: #{reverse.1} parent=4 // pred_region
        // Predicated region
        $region21: #{reverse.1} parent=8 // pred_check
          _
        $region22: #{reverse.1} parent=8 // pred_check_branch
          %24 = sbr.rel (0) target = $region24
        $region23: #{reverse.1} parent=8 // pred_region
          loop: start=0, step=1, limit=1
          $region25: #{reverse.1} parent=23 // loop_pre_header
            _
          $region26: #{reverse.1} parent=23 // loop_header
            %s26 = sphi 0, %s30
            %p27 = scmp.ge.s32.totalorder %s26, 1
            %s31 = sphi %s0, %s0
            %s32 = sphi %s2, %s2
          $region27: #{reverse.1} parent=23 // loop_header_branch
            %29 = sbr.rel (%p27) target = $region31
          $region28: #{reverse.1} parent=23 // loop_body
            %v33 = vld [vmem:[%s31] sm:$0xff]
            %34 = vst [vmem:[%s32] sm:$0xff] %v33
            %v35 = vld [vmem:[%s31 + $0x8] sm:$0xff]
            %36 = vst [vmem:[%s32 + $0x10] sm:$0xff] %v35
          $region29: #{reverse.1} parent=23 // loop_footer
            %s30 = sadd.s32 1, %s26
          $region30: #{reverse.1} parent=23 // loop_footer_branch
            %25 = sbr.rel target = $region26
          $region31: #{reverse.1} parent=23 // loop_exit
            _
        $region24: #{reverse.1} parent=8 // pred_fallthru
          _
        // Predicated region
        $region32: #{reverse.1} parent=8 // pred_check
          _
        $region33: #{reverse.1} parent=8 // pred_check_branch
          %38 = sbr.rel target = $region35
        $region34: #{reverse.1} parent=8 // pred_region
          _
        $region35: #{reverse.1} parent=8 // pred_fallthru
          _
      $region9: #{reverse.1} parent=4 // pred_fallthru
        _
      // Predicated region
      $region10: #{reverse.1} parent=4 // pred_check
        _
      $region11: #{reverse.1} parent=4 // pred_check_branch
        %8 = sbr.rel target = $region13
      $region12: #{reverse.1} parent=4 // pred_region
        %s10 = ssub.s32 256, 1
        loop: start=0, step=1, limit=1
        $region14: #{reverse.1} parent=12 // loop_pre_header
          _
        $region15: #{reverse.1} parent=12 // loop_header
          %s12 = sphi 0, %s16
          %p13 = scmp.ge.s32.totalorder %s12, 1
          %s17 = sphi %s0, %s0
          %s18 = sphi %s2, %s2
        $region16: #{reverse.1} parent=12 // loop_header_branch
          %15 = sbr.rel (%p13) target = $region20
        $region17: #{reverse.1} parent=12 // loop_body
          %v19 = vld [vmem:[%s17] sm:%s10]
          %20 = vst [vmem:[%s18] sm:%s10] %v19
          %v21 = vld [vmem:[%s17 + $0x8] sm:%s10]
          %22 = vst [vmem:[%s18 + $0x10] sm:%s10] %v21
        $region18: #{reverse.1} parent=12 // loop_footer
          %s16 = sadd.s32 1, %s12
        $region19: #{reverse.1} parent=12 // loop_footer_branch
          %11 = sbr.rel target = $region15
        $region20: #{reverse.1} parent=12 // loop_exit
          _
      $region13: #{reverse.1} parent=4 // pred_fallthru
        _
    $region5: #{reverse.1} parent=1 // pred_fallthru
      _
    %39 = vnop
    %s40 = scalar_lea.vmem [#allocation0], 7
    %v41 = vld [vmem:[%s40] ss:$-1 sm:$0xff]
    %v42 = vrot.slane %v41, 1
    %43 = vst [vmem:[#allocation1] sm:$0xff] %v42
    %s44 = scalar_lea.vmem [#allocation0], 8
    %s45 = scalar_lea.vmem %s44, 7 [#allocation0]
    %v46 = vld [vmem:[%s45] ss:$-1 sm:$0xff]
    %v47 = vrot.slane %v46, 1
    %v48 = vlaneseq
    %v49 = vshrl.u32 %v48, 7
    %vm50 = vcmp.lt.s32.totalorder %v49, 7
    %51 = vst.msk [vmem:[#allocation1] sm:$0xff] %vm50, %v47
    %s52 = scalar_lea.vmem [#allocation1], 8
    %s53 = scalar_lea.vmem [#allocation0], 16
    %s54 = scalar_lea.vmem %s53, 7 [#allocation0]
    %v55 = vld [vmem:[%s54] ss:$-1 sm:$0xff]
    %v56 = vrot.slane %v55, 1
    %57 = vst [vmem:[%s52] sm:$0xff] %v56
    %s58 = scalar_lea.vmem %s53, 8 [#allocation0]
    %s59 = scalar_lea.vmem %s58, 7 [#allocation0]
    %v60 = vld [vmem:[%s59] ss:$-1 sm:$0xff]
    %v61 = vrot.slane %v60, 1
    %v62 = vlaneseq
    %v63 = vshrl.u32 %v62, 7
    %vm64 = vcmp.lt.s32.totalorder %v63, 7
    %65 = vst.msk [vmem:[%s52] sm:$0xff] %vm64, %v61
    // Predicated region
    $region36: #{reverse.1} parent=1 // pred_check
      _
    $region37: #{reverse.1} parent=1 // pred_check_branch
      %67 = sbr.rel (0) target = $region39
    $region38: #{reverse.1} parent=1 // pred_region
      // Predicated region
      $region40: #{reverse.1} parent=38 // pred_check
        _
      $region41: #{reverse.1} parent=38 // pred_check_branch
        %69 = sbr.rel (0) target = $region43
      $region42: #{reverse.1} parent=38 // pred_region
        // Predicated region
        $region55: #{reverse.1} parent=42 // pred_check
          _
        $region56: #{reverse.1} parent=42 // pred_check_branch
          %87 = sbr.rel (0) target = $region58
        $region57: #{reverse.1} parent=42 // pred_region
          loop: start=0, step=1, limit=1
          $region59: #{reverse.1} parent=57 // loop_pre_header
            _
          $region60: #{reverse.1} parent=57 // loop_header
            %s89 = sphi 0, %s93
            %p90 = scmp.ge.s32.totalorder %s89, 1
            %s94 = sphi [#allocation1], [#allocation1]
            %s95 = sphi %s1, %s1
          $region61: #{reverse.1} parent=57 // loop_header_branch
            %92 = sbr.rel (%p90) target = $region65
          $region62: #{reverse.1} parent=57 // loop_body
            %v96 = vld [vmem:[%s94] sm:$0xff]
            %97 = vst [vmem:[%s95] sm:$0xff] %v96
            %v98 = vld [vmem:[%s94 + $0x8] sm:$0xff]
            %99 = vst [vmem:[%s95 + $0x8] sm:$0xff] %v98
          $region63: #{reverse.1} parent=57 // loop_footer
            %s93 = sadd.s32 1, %s89
          $region64: #{reverse.1} parent=57 // loop_footer_branch
            %88 = sbr.rel target = $region60
          $region65: #{reverse.1} parent=57 // loop_exit
            _
        $region58: #{reverse.1} parent=42 // pred_fallthru
          _
        // Predicated region
        $region66: #{reverse.1} parent=42 // pred_check
          _
        $region67: #{reverse.1} parent=42 // pred_check_branch
          %101 = sbr.rel target = $region69
        $region68: #{reverse.1} parent=42 // pred_region
          _
        $region69: #{reverse.1} parent=42 // pred_fallthru
          _
      $region43: #{reverse.1} parent=38 // pred_fallthru
        _
      // Predicated region
      $region44: #{reverse.1} parent=38 // pred_check
        _
      $region45: #{reverse.1} parent=38 // pred_check_branch
        %71 = sbr.rel target = $region47
      $region46: #{reverse.1} parent=38 // pred_region
        %s73 = ssub.s32 256, 1
        loop: start=0, step=1, limit=1
        $region48: #{reverse.1} parent=46 // loop_pre_header
          _
        $region49: #{reverse.1} parent=46 // loop_header
          %s75 = sphi 0, %s79
          %p76 = scmp.ge.s32.totalorder %s75, 1
          %s80 = sphi [#allocation1], [#allocation1]
          %s81 = sphi %s1, %s1
        $region50: #{reverse.1} parent=46 // loop_header_branch
          %78 = sbr.rel (%p76) target = $region54
        $region51: #{reverse.1} parent=46 // loop_body
          %v82 = vld [vmem:[%s80] sm:%s73]
          %83 = vst [vmem:[%s81] sm:%s73] %v82
          %v84 = vld [vmem:[%s80 + $0x8] sm:%s73]
          %85 = vst [vmem:[%s81 + $0x8] sm:%s73] %v84
        $region52: #{reverse.1} parent=46 // loop_footer
          %s79 = sadd.s32 1, %s75
        $region53: #{reverse.1} parent=46 // loop_footer_branch
          %74 = sbr.rel target = $region49
        $region54: #{reverse.1} parent=46 // loop_exit
          _
      $region47: #{reverse.1} parent=38 // pred_fallthru
        _
    $region39: #{reverse.1} parent=1 // pred_fallthru
      _
    %102 = vnop

// kernel: sparse_kernel_ft1d_forward.1
$region0: #{sparse_kernel_ft1d_forward.1}
  #allocation0 [shape = 'u32[]', space=smem, size = 0x4, offset = 0x4, fixed_abs, tag = 'smem constant byte address 0x4 - core index']
  #allocation1 [shape = 'u32[72,128]{1,0:T(1,128)}', space=vmem, size = 0x9000, scoped, tag = 'internal scratch']
  %s0 = inlined_call_operand.vmem [shape: f32[3,2,256], index: 0, kind: input, shape index: {}]
  %s1 = inlined_call_operand.hbm [shape: f32[3,256,256], index: 1, kind: input, shape index: {}]
  %s2 = inlined_call_operand.vmem [shape: f32[3,2,256], index: 2, kind: output, shape index: {}]
  %s3 = sld [smem:[#allocation0]]
  $region22: #{sparse_kernel_ft1d_forward.1} parent=0
    _
  %s5 = ssub.s32 1, %s3
  %s6 = scalar_select 0, %s5, %s3
  $region1: #{sparse_kernel_ft1d_forward.1} parent=0
    #allocation2 [shape = 'u8[786432]{0}', space=vmem, size = 0xc0000, scoped, tag = 'input window, operand 1, single buffered']
    #allocation3 [shape = 's32[1]{0}', space=sflag, size = 0x4, scoped, tag = 'scoped memory for sparse_kernel_ft1d_forward.1']
    %7 = vsyncpa [#allocation3], 0
    // Predicated region
    $region2: #{sparse_kernel_ft1d_forward.1} parent=1 // pred_check
      _
    $region3: #{sparse_kernel_ft1d_forward.1} parent=1 // pred_check_branch
      %9 = sbr.rel (0) target = $region5
    $region4: #{sparse_kernel_ft1d_forward.1} parent=1 // pred_region
      _
    $region5: #{sparse_kernel_ft1d_forward.1} parent=1 // pred_fallthru
      _
    // Predicated region
    $region6: #{sparse_kernel_ft1d_forward.1} parent=1 // pred_check
      _
    $region7: #{sparse_kernel_ft1d_forward.1} parent=1 // pred_check_branch
      %11 = sbr.rel (0) target = $region9
    $region8: #{sparse_kernel_ft1d_forward.1} parent=1 // pred_region
      %13 = vsyncadd [#allocation3], 0
      %s14 = sshll.u32 %s1, 4
      %s15 = int_to_ptr.hbm [resolvable:$true] %s14
      %s16 = sshll.u32 [#allocation2], 4
      %s17 = int_to_ptr.vmem [resolvable:$true] %s16
      %22 = dma.hbm_to_vmem [thread:$0]  %s15, 24576, %s17, [#allocation3], 256, 256, 16
    $region9: #{sparse_kernel_ft1d_forward.1} parent=1 // pred_fallthru
      _
    // Predicated region
    $region10: #{sparse_kernel_ft1d_forward.1} parent=1 // pred_check
      _
    $region11: #{sparse_kernel_ft1d_forward.1} parent=1 // pred_check_branch
      %24 = sbr.rel (0) target = $region13
    $region12: #{sparse_kernel_ft1d_forward.1} parent=1 // pred_region
      %26 = dma.done [#allocation3], 24576
    $region13: #{sparse_kernel_ft1d_forward.1} parent=1 // pred_fallthru
      _
    %v27 = vld [vmem:[%s0] sm:$0xf]
    %v28 = vld [vmem:[#allocation2] sm:$0xff]
    %v29 = vld [vmem:[#allocation2 + $0x8] sm:$0xff]
    %v30 = vld [vmem:[#allocation2 + $0x10] sm:$0xff]
    %v31 = vld [vmem:[#allocation2 + $0x18] sm:$0xff]
    %v32 = vld [vmem:[#allocation2 + $0x20] sm:$0xff]
    %v33 = vld [vmem:[#allocation2 + $0x28] sm:$0xff]
    %v34 = vld [vmem:[#allocation2 + $0x30] sm:$0xff]
    %v35 = vld [vmem:[#allocation2 + $0x38] sm:$0xff]
    %v36 = vld [vmem:[#allocation2 + $0x40] sm:$0xff]
    %v37 = vld [vmem:[#allocation2 + $0x48] sm:$0xff]
    %v38 = vld [vmem:[#allocation2 + $0x50] sm:$0xff]
    %v39 = vld [vmem:[#allocation2 + $0x58] sm:$0xff]
    %v40 = vld [vmem:[#allocation2 + $0x60] sm:$0xff]
    %v41 = vld [vmem:[#allocation2 + $0x68] sm:$0xff]
    %v42 = vld [vmem:[#allocation2 + $0x70] sm:$0xff]
    %v43 = vld [vmem:[#allocation2 + $0x78] sm:$0xff]
    %v44 = vld [vmem:[#allocation2 + $0x80] sm:$0xff]
    %v45 = vld [vmem:[#allocation2 + $0x88] sm:$0xff]
    %v46 = vld [vmem:[#allocation2 + $0x90] sm:$0xff]
    %v47 = vld [vmem:[#allocation2 + $0x98] sm:$0xff]
    %v48 = vld [vmem:[#allocation2 + $0xa0] sm:$0xff]
    %v49 = vld [vmem:[#allocation2 + $0xa8] sm:$0xff]
    %v50 = vld [vmem:[#allocation2 + $0xb0] sm:$0xff]
    %v51 = vld [vmem:[#allocation2 + $0xb8] sm:$0xff]
    %v52 = vld [vmem:[#allocation2 + $0xc0] sm:$0xff]
    %v53 = vld [vmem:[#allocation2 + $0xc8] sm:$0xff]
    %v54 = vld [vmem:[#allocation2 + $0xd0] sm:$0xff]
    %v55 = vld [vmem:[#allocation2 + $0xd8] sm:$0xff]
    %v56 = vld [vmem:[#allocation2 + $0xe0] sm:$0xff]
    %v57 = vld [vmem:[#allocation2 + $0xe8] sm:$0xff]
    %v58 = vld [vmem:[#allocation2 + $0xf0] sm:$0xff]
    %v59 = vld [vmem:[#allocation2 + $0xf8] sm:$0xff]
    %v60 = vld [vmem:[#allocation2 + $0x100] sm:$0xff]
    %v61 = vld [vmem:[#allocation2 + $0x108] sm:$0xff]
    %v62 = vld [vmem:[#allocation2 + $0x110] sm:$0xff]
    %v63 = vld [vmem:[#allocation2 + $0x118] sm:$0xff]
    %v64 = vld [vmem:[#allocation2 + $0x120] sm:$0xff]
    %v65 = vld [vmem:[#allocation2 + $0x128] sm:$0xff]
    %v66 = vld [vmem:[#allocation2 + $0x130] sm:$0xff]
    %v67 = vld [vmem:[#allocation2 + $0x138] sm:$0xff]
    %v68 = vld [vmem:[#allocation2 + $0x140] sm:$0xff]
    %v69 = vld [vmem:[#allocation2 + $0x148] sm:$0xff]
    %v70 = vld [vmem:[#allocation2 + $0x150] sm:$0xff]
    %v71 = vld [vmem:[#allocation2 + $0x158] sm:$0xff]
    %v72 = vld [vmem:[#allocation2 + $0x160] sm:$0xff]
    %v73 = vld [vmem:[#allocation2 + $0x168] sm:$0xff]
    %v74 = vld [vmem:[#allocation2 + $0x170] sm:$0xff]
    %v75 = vld [vmem:[#allocation2 + $0x178] sm:$0xff]
    %v76 = vld [vmem:[#allocation2 + $0x180] sm:$0xff]
    %v77 = vld [vmem:[#allocation2 + $0x188] sm:$0xff]
    %v78 = vld [vmem:[#allocation2 + $0x190] sm:$0xff]
    %v79 = vld [vmem:[#allocation2 + $0x198] sm:$0xff]
    %v80 = vld [vmem:[#allocation2 + $0x1a0] sm:$0xff]
    %v81 = vld [vmem:[#allocation2 + $0x1a8] sm:$0xff]
    %v82 = vld [vmem:[#allocation2 + $0x1b0] sm:$0xff]
    %v83 = vld [vmem:[#allocation2 + $0x1b8] sm:$0xff]
    %v84 = vld [vmem:[#allocation2 + $0x1c0] sm:$0xff]
    %v85 = vld [vmem:[#allocation2 + $0x1c8] sm:$0xff]
    %v86 = vld [vmem:[#allocation2 + $0x1d0] sm:$0xff]
    %v87 = vld [vmem:[#allocation2 + $0x1d8] sm:$0xff]
    %v88 = vld [vmem:[#allocation2 + $0x1e0] sm:$0xff]
    %v89 = vld [vmem:[#allocation2 + $0x1e8] sm:$0xff]
    %v90 = vld [vmem:[#allocation2 + $0x1f0] sm:$0xff]
    %v91 = vld [vmem:[#allocation2 + $0x1f8] sm:$0xff]
    %93 = vst [vmem:[#allocation1] ss:$4 sm:$0xff] %v27
    %v94 = vld.sshfl [vmem:[#allocation1] sm:$0xff pattern:$0x73625140]
    %v95 = vld.sshfl [vmem:[#allocation1 + $0x8] sm:$0xff pattern:$0x73625140]
    %98 = vmatpush.msra.mxu0 %v58
    %99 = vmatpush.msra.mxu0 %v56
    %100 = vmatpush.msra.mxu0 %v54
    %101 = vmatpush.msra.mxu0 %v52
    %102 = vmatpush.msra.mxu0 %v50
    %103 = vmatpush.msra.mxu0 %v48
    %104 = vmatpush.msra.mxu0 %v46
    %105 = vmatpush.msra.mxu0 %v44
    %106 = vmatpush.msra.mxu0 %v42
    %107 = vmatpush.msra.mxu0 %v40
    %108 = vmatpush.msra.mxu0 %v38
    %109 = vmatpush.msra.mxu0 %v36
    %110 = vmatpush.msra.mxu0 %v34
    %111 = vmatpush.msra.mxu0 %v32
    %112 = vmatpush.msra.mxu0 %v30
    %113 = vmatpush.msra.mxu0 %v28
    %114 = vmatmul.f32.gmra.mxu0 %v94
    %v115 = vpop.f32.mrf.mxu0
    %v116 = vadd.f32 0.0, %v115
    %117 = vdwg.mxu0
    %118 = vmatpush.msra.mxu0 %v90
    %119 = vmatpush.msra.mxu0 %v88
    %120 = vmatpush.msra.mxu0 %v86
    %121 = vmatpush.msra.mxu0 %v84
    %122 = vmatpush.msra.mxu0 %v82
    %123 = vmatpush.msra.mxu0 %v80
    %124 = vmatpush.msra.mxu0 %v78
    %125 = vmatpush.msra.mxu0 %v76
    %126 = vmatpush.msra.mxu0 %v74
    %127 = vmatpush.msra.mxu0 %v72
    %128 = vmatpush.msra.mxu0 %v70
    %129 = vmatpush.msra.mxu0 %v68
    %130 = vmatpush.msra.mxu0 %v66
    %131 = vmatpush.msra.mxu0 %v64
    %132 = vmatpush.msra.mxu0 %v62
    %133 = vmatpush.msra.mxu0 %v60
    %134 = vmatmul.f32.gmra.mxu0 %v95
    %v135 = vpop.f32.mrf.mxu0
    %v136 = vadd.f32 %v116, %v135
    %137 = vdwg.mxu0
    %138 = vmatpush.msra.mxu0 %v59
    %139 = vmatpush.msra.mxu0 %v57
    %140 = vmatpush.msra.mxu0 %v55
    %141 = vmatpush.msra.mxu0 %v53
    %142 = vmatpush.msra.mxu0 %v51
    %143 = vmatpush.msra.mxu0 %v49
    %144 = vmatpush.msra.mxu0 %v47
    %145 = vmatpush.msra.mxu0 %v45
    %146 = vmatpush.msra.mxu0 %v43
    %147 = vmatpush.msra.mxu0 %v41
    %148 = vmatpush.msra.mxu0 %v39
    %149 = vmatpush.msra.mxu0 %v37
    %150 = vmatpush.msra.mxu0 %v35
    %151 = vmatpush.msra.mxu0 %v33
    %152 = vmatpush.msra.mxu0 %v31
    %153 = vmatpush.msra.mxu0 %v29
    %154 = vmatmul.f32.gmra.mxu0 %v94
    %v155 = vpop.f32.mrf.mxu0
    %v156 = vadd.f32 0.0, %v155
    %157 = vdwg.mxu0
    %158 = vmatpush.msra.mxu0 %v91
    %159 = vmatpush.msra.mxu0 %v89
    %160 = vmatpush.msra.mxu0 %v87
    %161 = vmatpush.msra.mxu0 %v85
    %162 = vmatpush.msra.mxu0 %v83
    %163 = vmatpush.msra.mxu0 %v81
    %164 = vmatpush.msra.mxu0 %v79
    %165 = vmatpush.msra.mxu0 %v77
    %166 = vmatpush.msra.mxu0 %v75
    %167 = vmatpush.msra.mxu0 %v73
    %168 = vmatpush.msra.mxu0 %v71
    %169 = vmatpush.msra.mxu0 %v69
    %170 = vmatpush.msra.mxu0 %v67
    %171 = vmatpush.msra.mxu0 %v65
    %172 = vmatpush.msra.mxu0 %v63
    %173 = vmatpush.msra.mxu0 %v61
    %174 = vmatmul.f32.gmra.mxu0 %v95
    %v175 = vpop.f32.mrf.mxu0
    %v176 = vadd.f32 %v156, %v175
    %177 = vdwg.mxu0
    %v180 = vrot.slane %v176, 6
    %vm181 = vcmask 1041408
    %v182 = vsel %vm181, %v136, %v180
    %184 = vst [vmem:[%s2] sm:$0xf] %v182
    %s185 = scalar_lea.vmem %s0, 4
    %v186 = vld [vmem:[%s185] sm:$0xf]
    %s187 = scalar_lea.vmem [#allocation2], 512
    %v188 = vld [vmem:[%s187] sm:$0xff]
    %v189 = vld [vmem:[%s187 + $0x8] sm:$0xff]
    %v190 = vld [vmem:[%s187 + $0x10] sm:$0xff]
    %v191 = vld [vmem:[%s187 + $0x18] sm:$0xff]
    %v192 = vld [vmem:[%s187 + $0x20] sm:$0xff]
    %v193 = vld [vmem:[%s187 + $0x28] sm:$0xff]
    %v194 = vld [vmem:[%s187 + $0x30] sm:$0xff]
    %v195 = vld [vmem:[%s187 + $0x38] sm:$0xff]
    %v196 = vld [vmem:[%s187 + $0x40] sm:$0xff]
    %v197 = vld [vmem:[%s187 + $0x48] sm:$0xff]
    %v198 = vld [vmem:[%s187 + $0x50] sm:$0xff]
    %v199 = vld [vmem:[%s187 + $0x58] sm:$0xff]
    %v200 = vld [vmem:[%s187 + $0x60] sm:$0xff]
    %v201 = vld [vmem:[%s187 + $0x68] sm:$0xff]
    %v202 = vld [vmem:[%s187 + $0x70] sm:$0xff]
    %v203 = vld [vmem:[%s187 + $0x78] sm:$0xff]
    %v204 = vld [vmem:[%s187 + $0x80] sm:$0xff]
    %v205 = vld [vmem:[%s187 + $0x88] sm:$0xff]
    %v206 = vld [vmem:[%s187 + $0x90] sm:$0xff]
    %v207 = vld [vmem:[%s187 + $0x98] sm:$0xff]
    %v208 = vld [vmem:[%s187 + $0xa0] sm:$0xff]
    %v209 = vld [vmem:[%s187 + $0xa8] sm:$0xff]
    %v210 = vld [vmem:[%s187 + $0xb0] sm:$0xff]
    %v211 = vld [vmem:[%s187 + $0xb8] sm:$0xff]
    %v212 = vld [vmem:[%s187 + $0xc0] sm:$0xff]
    %v213 = vld [vmem:[%s187 + $0xc8] sm:$0xff]
    %v214 = vld [vmem:[%s187 + $0xd0] sm:$0xff]
    %v215 = vld [vmem:[%s187 + $0xd8] sm:$0xff]
    %v216 = vld [vmem:[%s187 + $0xe0] sm:$0xff]
    %v217 = vld [vmem:[%s187 + $0xe8] sm:$0xff]
    %v218 = vld [vmem:[%s187 + $0xf0] sm:$0xff]
    %v219 = vld [vmem:[%s187 + $0xf8] sm:$0xff]
    %v220 = vld [vmem:[%s187 + $0x100] sm:$0xff]
    %v221 = vld [vmem:[%s187 + $0x108] sm:$0xff]
    %v222 = vld [vmem:[%s187 + $0x110] sm:$0xff]
    %v223 = vld [vmem:[%s187 + $0x118] sm:$0xff]
    %v224 = vld [vmem:[%s187 + $0x120] sm:$0xff]
    %v225 = vld [vmem:[%s187 + $0x128] sm:$0xff]
    %v226 = vld [vmem:[%s187 + $0x130] sm:$0xff]
    %v227 = vld [vmem:[%s187 + $0x138] sm:$0xff]
    %v228 = vld [vmem:[%s187 + $0x140] sm:$0xff]
    %v229 = vld [vmem:[%s187 + $0x148] sm:$0xff]
    %v230 = vld [vmem:[%s187 + $0x150] sm:$0xff]
    %v231 = vld [vmem:[%s187 + $0x158] sm:$0xff]
    %v232 = vld [vmem:[%s187 + $0x160] sm:$0xff]
    %v233 = vld [vmem:[%s187 + $0x168] sm:$0xff]
    %v234 = vld [vmem:[%s187 + $0x170] sm:$0xff]
    %v235 = vld [vmem:[%s187 + $0x178] sm:$0xff]
    %v236 = vld [vmem:[%s187 + $0x180] sm:$0xff]
    %v237 = vld [vmem:[%s187 + $0x188] sm:$0xff]
    %v238 = vld [vmem:[%s187 + $0x190] sm:$0xff]
    %v239 = vld [vmem:[%s187 + $0x198] sm:$0xff]
    %v240 = vld [vmem:[%s187 + $0x1a0] sm:$0xff]
    %v241 = vld [vmem:[%s187 + $0x1a8] sm:$0xff]
    %v242 = vld [vmem:[%s187 + $0x1b0] sm:$0xff]
    %v243 = vld [vmem:[%s187 + $0x1b8] sm:$0xff]
    %v244 = vld [vmem:[%s187 + $0x1c0] sm:$0xff]
    %v245 = vld [vmem:[%s187 + $0x1c8] sm:$0xff]
    %v246 = vld [vmem:[%s187 + $0x1d0] sm:$0xff]
    %v247 = vld [vmem:[%s187 + $0x1d8] sm:$0xff]
    %v248 = vld [vmem:[%s187 + $0x1e0] sm:$0xff]
    %v249 = vld [vmem:[%s187 + $0x1e8] sm:$0xff]
    %v250 = vld [vmem:[%s187 + $0x1f0] sm:$0xff]
    %v251 = vld [vmem:[%s187 + $0x1f8] sm:$0xff]
    %253 = vst [vmem:[#allocation1] ss:$4 sm:$0xff] %v186
    %v254 = vld.sshfl [vmem:[#allocation1] sm:$0xff pattern:$0x73625140]
    %v255 = vld.sshfl [vmem:[#allocation1 + $0x8] sm:$0xff pattern:$0x73625140]
    %258 = vmatpush.msra.mxu0 %v218
    %259 = vmatpush.msra.mxu0 %v216
    %260 = vmatpush.msra.mxu0 %v214
    %261 = vmatpush.msra.mxu0 %v212
    %262 = vmatpush.msra.mxu0 %v210
    %263 = vmatpush.msra.mxu0 %v208
    %264 = vmatpush.msra.mxu0 %v206
    %265 = vmatpush.msra.mxu0 %v204
    %266 = vmatpush.msra.mxu0 %v202
    %267 = vmatpush.msra.mxu0 %v200
    %268 = vmatpush.msra.mxu0 %v198
    %269 = vmatpush.msra.mxu0 %v196
    %270 = vmatpush.msra.mxu0 %v194
    %271 = vmatpush.msra.mxu0 %v192
    %272 = vmatpush.msra.mxu0 %v190
    %273 = vmatpush.msra.mxu0 %v188
    %274 = vmatmul.f32.gmra.mxu0 %v254
    %v275 = vpop.f32.mrf.mxu0
    %v276 = vadd.f32 0.0, %v275
    %277 = vdwg.mxu0
    %278 = vmatpush.msra.mxu0 %v250
    %279 = vmatpush.msra.mxu0 %v248
    %280 = vmatpush.msra.mxu0 %v246
    %281 = vmatpush.msra.mxu0 %v244
    %282 = vmatpush.msra.mxu0 %v242
    %283 = vmatpush.msra.mxu0 %v240
    %284 = vmatpush.msra.mxu0 %v238
    %285 = vmatpush.msra.mxu0 %v236
    %286 = vmatpush.msra.mxu0 %v234
    %287 = vmatpush.msra.mxu0 %v232
    %288 = vmatpush.msra.mxu0 %v230
    %289 = vmatpush.msra.mxu0 %v228
    %290 = vmatpush.msra.mxu0 %v226
    %291 = vmatpush.msra.mxu0 %v224
    %292 = vmatpush.msra.mxu0 %v222
    %293 = vmatpush.msra.mxu0 %v220
    %294 = vmatmul.f32.gmra.mxu0 %v255
    %v295 = vpop.f32.mrf.mxu0
    %v296 = vadd.f32 %v276, %v295
    %297 = vdwg.mxu0
    %298 = vmatpush.msra.mxu0 %v219
    %299 = vmatpush.msra.mxu0 %v217
    %300 = vmatpush.msra.mxu0 %v215
    %301 = vmatpush.msra.mxu0 %v213
    %302 = vmatpush.msra.mxu0 %v211
    %303 = vmatpush.msra.mxu0 %v209
    %304 = vmatpush.msra.mxu0 %v207
    %305 = vmatpush.msra.mxu0 %v205
    %306 = vmatpush.msra.mxu0 %v203
    %307 = vmatpush.msra.mxu0 %v201
    %308 = vmatpush.msra.mxu0 %v199
    %309 = vmatpush.msra.mxu0 %v197
    %310 = vmatpush.msra.mxu0 %v195
    %311 = vmatpush.msra.mxu0 %v193
    %312 = vmatpush.msra.mxu0 %v191
    %313 = vmatpush.msra.mxu0 %v189
    %314 = vmatmul.f32.gmra.mxu0 %v254
    %v315 = vpop.f32.mrf.mxu0
    %v316 = vadd.f32 0.0, %v315
    %317 = vdwg.mxu0
    %318 = vmatpush.msra.mxu0 %v251
    %319 = vmatpush.msra.mxu0 %v249
    %320 = vmatpush.msra.mxu0 %v247
    %321 = vmatpush.msra.mxu0 %v245
    %322 = vmatpush.msra.mxu0 %v243
    %323 = vmatpush.msra.mxu0 %v241
    %324 = vmatpush.msra.mxu0 %v239
    %325 = vmatpush.msra.mxu0 %v237
    %326 = vmatpush.msra.mxu0 %v235
    %327 = vmatpush.msra.mxu0 %v233
    %328 = vmatpush.msra.mxu0 %v231
    %329 = vmatpush.msra.mxu0 %v229
    %330 = vmatpush.msra.mxu0 %v227
    %331 = vmatpush.msra.mxu0 %v225
    %332 = vmatpush.msra.mxu0 %v223
    %333 = vmatpush.msra.mxu0 %v221
    %334 = vmatmul.f32.gmra.mxu0 %v255
    %v335 = vpop.f32.mrf.mxu0
    %v336 = vadd.f32 %v316, %v335
    %337 = vdwg.mxu0
    %v340 = vrot.slane %v336, 6
    %v341 = vsel %vm181, %v296, %v340
    %s343 = scalar_lea.vmem %s2, 4
    %344 = vst [vmem:[%s343] sm:$0xf] %v341
    %s345 = scalar_lea.vmem %s0, 8
    %v346 = vld [vmem:[%s345] sm:$0xf]
    %s347 = scalar_lea.vmem [#allocation2], 1024
    %v348 = vld [vmem:[%s347] sm:$0xff]
    %v349 = vld [vmem:[%s347 + $0x8] sm:$0xff]
    %v350 = vld [vmem:[%s347 + $0x10] sm:$0xff]
    %v351 = vld [vmem:[%s347 + $0x18] sm:$0xff]
    %v352 = vld [vmem:[%s347 + $0x20] sm:$0xff]
    %v353 = vld [vmem:[%s347 + $0x28] sm:$0xff]
    %v354 = vld [vmem:[%s347 + $0x30] sm:$0xff]
    %v355 = vld [vmem:[%s347 + $0x38] sm:$0xff]
    %v356 = vld [vmem:[%s347 + $0x40] sm:$0xff]
    %v357 = vld [vmem:[%s347 + $0x48] sm:$0xff]
    %v358 = vld [vmem:[%s347 + $0x50] sm:$0xff]
    %v359 = vld [vmem:[%s347 + $0x58] sm:$0xff]
    %v360 = vld [vmem:[%s347 + $0x60] sm:$0xff]
    %v361 = vld [vmem:[%s347 + $0x68] sm:$0xff]
    %v362 = vld [vmem:[%s347 + $0x70] sm:$0xff]
    %v363 = vld [vmem:[%s347 + $0x78] sm:$0xff]
    %v364 = vld [vmem:[%s347 + $0x80] sm:$0xff]
    %v365 = vld [vmem:[%s347 + $0x88] sm:$0xff]
    %v366 = vld [vmem:[%s347 + $0x90] sm:$0xff]
    %v367 = vld [vmem:[%s347 + $0x98] sm:$0xff]
    %v368 = vld [vmem:[%s347 + $0xa0] sm:$0xff]
    %v369 = vld [vmem:[%s347 + $0xa8] sm:$0xff]
    %v370 = vld [vmem:[%s347 + $0xb0] sm:$0xff]
    %v371 = vld [vmem:[%s347 + $0xb8] sm:$0xff]
    %v372 = vld [vmem:[%s347 + $0xc0] sm:$0xff]
    %v373 = vld [vmem:[%s347 + $0xc8] sm:$0xff]
    %v374 = vld [vmem:[%s347 + $0xd0] sm:$0xff]
    %v375 = vld [vmem:[%s347 + $0xd8] sm:$0xff]
    %v376 = vld [vmem:[%s347 + $0xe0] sm:$0xff]
    %v377 = vld [vmem:[%s347 + $0xe8] sm:$0xff]
    %v378 = vld [vmem:[%s347 + $0xf0] sm:$0xff]
    %v379 = vld [vmem:[%s347 + $0xf8] sm:$0xff]
    %v380 = vld [vmem:[%s347 + $0x100] sm:$0xff]
    %v381 = vld [vmem:[%s347 + $0x108] sm:$0xff]
    %v382 = vld [vmem:[%s347 + $0x110] sm:$0xff]
    %v383 = vld [vmem:[%s347 + $0x118] sm:$0xff]
    %v384 = vld [vmem:[%s347 + $0x120] sm:$0xff]
    %v385 = vld [vmem:[%s347 + $0x128] sm:$0xff]
    %v386 = vld [vmem:[%s347 + $0x130] sm:$0xff]
    %v387 = vld [vmem:[%s347 + $0x138] sm:$0xff]
    %v388 = vld [vmem:[%s347 + $0x140] sm:$0xff]
    %v389 = vld [vmem:[%s347 + $0x148] sm:$0xff]
    %v390 = vld [vmem:[%s347 + $0x150] sm:$0xff]
    %v391 = vld [vmem:[%s347 + $0x158] sm:$0xff]
    %v392 = vld [vmem:[%s347 + $0x160] sm:$0xff]
    %v393 = vld [vmem:[%s347 + $0x168] sm:$0xff]
    %v394 = vld [vmem:[%s347 + $0x170] sm:$0xff]
    %v395 = vld [vmem:[%s347 + $0x178] sm:$0xff]
    %v396 = vld [vmem:[%s347 + $0x180] sm:$0xff]
    %v397 = vld [vmem:[%s347 + $0x188] sm:$0xff]
    %v398 = vld [vmem:[%s347 + $0x190] sm:$0xff]
    %v399 = vld [vmem:[%s347 + $0x198] sm:$0xff]
    %v400 = vld [vmem:[%s347 + $0x1a0] sm:$0xff]
    %v401 = vld [vmem:[%s347 + $0x1a8] sm:$0xff]
    %v402 = vld [vmem:[%s347 + $0x1b0] sm:$0xff]
    %v403 = vld [vmem:[%s347 + $0x1b8] sm:$0xff]
    %v404 = vld [vmem:[%s347 + $0x1c0] sm:$0xff]
    %v405 = vld [vmem:[%s347 + $0x1c8] sm:$0xff]
    %v406 = vld [vmem:[%s347 + $0x1d0] sm:$0xff]
    %v407 = vld [vmem:[%s347 + $0x1d8] sm:$0xff]
    %v408 = vld [vmem:[%s347 + $0x1e0] sm:$0xff]
    %v409 = vld [vmem:[%s347 + $0x1e8] sm:$0xff]
    %v410 = vld [vmem:[%s347 + $0x1f0] sm:$0xff]
    %v411 = vld [vmem:[%s347 + $0x1f8] sm:$0xff]
    %413 = vst [vmem:[#allocation1] ss:$4 sm:$0xff] %v346
    %v414 = vld.sshfl [vmem:[#allocation1] sm:$0xff pattern:$0x73625140]
    %v415 = vld.sshfl [vmem:[#allocation1 + $0x8] sm:$0xff pattern:$0x73625140]
    %418 = vmatpush.msra.mxu0 %v378
    %419 = vmatpush.msra.mxu0 %v376
    %420 = vmatpush.msra.mxu0 %v374
    %421 = vmatpush.msra.mxu0 %v372
    %422 = vmatpush.msra.mxu0 %v370
    %423 = vmatpush.msra.mxu0 %v368
    %424 = vmatpush.msra.mxu0 %v366
    %425 = vmatpush.msra.mxu0 %v364
    %426 = vmatpush.msra.mxu0 %v362
    %427 = vmatpush.msra.mxu0 %v360
    %428 = vmatpush.msra.mxu0 %v358
    %429 = vmatpush.msra.mxu0 %v356
    %430 = vmatpush.msra.mxu0 %v354
    %431 = vmatpush.msra.mxu0 %v352
    %432 = vmatpush.msra.mxu0 %v350
    %433 = vmatpush.msra.mxu0 %v348
    %434 = vmatmul.f32.gmra.mxu0 %v414
    %v435 = vpop.f32.mrf.mxu0
    %v436 = vadd.f32 0.0, %v435
    %437 = vdwg.mxu0
    %438 = vmatpush.msra.mxu0 %v410
    %439 = vmatpush.msra.mxu0 %v408
    %440 = vmatpush.msra.mxu0 %v406
    %441 = vmatpush.msra.mxu0 %v404
    %442 = vmatpush.msra.mxu0 %v402
    %443 = vmatpush.msra.mxu0 %v400
    %444 = vmatpush.msra.mxu0 %v398
    %445 = vmatpush.msra.mxu0 %v396
    %446 = vmatpush.msra.mxu0 %v394
    %447 = vmatpush.msra.mxu0 %v392
    %448 = vmatpush.msra.mxu0 %v390
    %449 = vmatpush.msra.mxu0 %v388
    %450 = vmatpush.msra.mxu0 %v386
    %451 = vmatpush.msra.mxu0 %v384
    %452 = vmatpush.msra.mxu0 %v382
    %453 = vmatpush.msra.mxu0 %v380
    %454 = vmatmul.f32.gmra.mxu0 %v415
    %v455 = vpop.f32.mrf.mxu0
    %v456 = vadd.f32 %v436, %v455
    %457 = vdwg.mxu0
    %458 = vmatpush.msra.mxu0 %v379
    %459 = vmatpush.msra.mxu0 %v377
    %460 = vmatpush.msra.mxu0 %v375
    %461 = vmatpush.msra.mxu0 %v373
    %462 = vmatpush.msra.mxu0 %v371
    %463 = vmatpush.msra.mxu0 %v369
    %464 = vmatpush.msra.mxu0 %v367
    %465 = vmatpush.msra.mxu0 %v365
    %466 = vmatpush.msra.mxu0 %v363
    %467 = vmatpush.msra.mxu0 %v361
    %468 = vmatpush.msra.mxu0 %v359
    %469 = vmatpush.msra.mxu0 %v357
    %470 = vmatpush.msra.mxu0 %v355
    %471 = vmatpush.msra.mxu0 %v353
    %472 = vmatpush.msra.mxu0 %v351
    %473 = vmatpush.msra.mxu0 %v349
    %474 = vmatmul.f32.gmra.mxu0 %v414
    %v475 = vpop.f32.mrf.mxu0
    %v476 = vadd.f32 0.0, %v475
    %477 = vdwg.mxu0
    %478 = vmatpush.msra.mxu0 %v411
    %479 = vmatpush.msra.mxu0 %v409
    %480 = vmatpush.msra.mxu0 %v407
    %481 = vmatpush.msra.mxu0 %v405
    %482 = vmatpush.msra.mxu0 %v403
    %483 = vmatpush.msra.mxu0 %v401
    %484 = vmatpush.msra.mxu0 %v399
    %485 = vmatpush.msra.mxu0 %v397
    %486 = vmatpush.msra.mxu0 %v395
    %487 = vmatpush.msra.mxu0 %v393
    %488 = vmatpush.msra.mxu0 %v391
    %489 = vmatpush.msra.mxu0 %v389
    %490 = vmatpush.msra.mxu0 %v387
    %491 = vmatpush.msra.mxu0 %v385
    %492 = vmatpush.msra.mxu0 %v383
    %493 = vmatpush.msra.mxu0 %v381
    %494 = vmatmul.f32.gmra.mxu0 %v415
    %v495 = vpop.f32.mrf.mxu0
    %v496 = vadd.f32 %v476, %v495
    %497 = vdwg.mxu0
    %v500 = vrot.slane %v496, 6
    %v501 = vsel %vm181, %v456, %v500
    %s503 = scalar_lea.vmem %s2, 8
    %504 = vst [vmem:[%s503] sm:$0xf] %v501
    // Predicated region
    $region14: #{sparse_kernel_ft1d_forward.1} parent=1 // pred_check
      _
    $region15: #{sparse_kernel_ft1d_forward.1} parent=1 // pred_check_branch
      %506 = sbr.rel (0) target = $region17
    $region16: #{sparse_kernel_ft1d_forward.1} parent=1 // pred_region
      _
    $region17: #{sparse_kernel_ft1d_forward.1} parent=1 // pred_fallthru
      _
    // Predicated region
    $region18: #{sparse_kernel_ft1d_forward.1} parent=1 // pred_check
      _
    $region19: #{sparse_kernel_ft1d_forward.1} parent=1 // pred_check_branch
      %508 = sbr.rel (0) target = $region21
    $region20: #{sparse_kernel_ft1d_forward.1} parent=1 // pred_region
      _
    $region21: #{sparse_kernel_ft1d_forward.1} parent=1 // pred_fallthru
      _
    %509 = vsyncpa [#allocation3], 1

</llo_original>
